<compile_context>
chip_gen: v5e
topology: v5e:2x2
jax: 0.10.0
libtpu: 0.0.40
codegen_flags: <defaults>
</compile_context>

<pallas_src>
import functools

import jax
import jax.numpy as jnp
from jax.experimental import pallas as pl
from jax.experimental.pallas import tpu as pltpu

_SUB = 16  # sublane alignment that is safe for both f32 (8) and bf16 (16)


def _round_up(x, m):
    return (x + m - 1) // m * m


def _pick_seq_tiling(S, tn, B, per_row_bytes, resident_bytes):
    """Balanced sequence tiles, capped by a conservative VMEM budget."""
    budget = 12 * 1024 * 1024 - resident_bytes
    cap = max(_SUB, (budget // max(per_row_bytes, 1)) // _SUB * _SUB)
    tn = max(_SUB, min(tn, cap))
    t = pl.cdiv(S, tn)
    if B * t < 2 and S >= 2 * _SUB:
        t = 2                                   # keep both v7x cores busy
    tn_eff = _round_up(pl.cdiv(S, t), _SUB)     # balanced tiles, waste < _SUB
    t = pl.cdiv(S, tn_eff)
    return tn_eff, t


def _embed_kernel(x_ref, w_ref, pos_ref, o_ref):
    # x_ref:   (1, TN, D_in)   bf16 rows (row 0 of the sequence is the zero
    #                          "cls" row; tail rows are zero padding)
    # w_ref:   (D_in, D_pad)   bf16 W^T, feature-padded, single-buffered
    # pos_ref: (TN, D_pad)     f32: row 0 = cls + pos[0]; rows 1..N = pos + b
    # o_ref:   (1, TN, D_pad)  output tile (lane-dense, sublane-aligned)
    y = jnp.dot(x_ref[0], w_ref[...], preferred_element_type=jnp.float32)
    o_ref[0] = (y + pos_ref[...]).astype(o_ref.dtype)


@functools.partial(jax.jit, static_argnames=("patch_size", "tn", "out_dtype"))
def input_embed(x_nchw, w, b, cls_tok, pos, *, patch_size, tn=256,
                out_dtype=jnp.float32):
    """x_nchw: (B, C, H, W) f32.  w: (D_out, D_in) (PyTorch Linear layout),
    b: (D_out,), cls_tok: (1, 1, D_out), pos: (1, N+1, D_out)."""
    B, C, H, W = x_nchw.shape
    p = patch_size
    hh, ww = H // p, W // p
    N = hh * ww
    S = N + 1                       # cls + patches
    D_in = C * p * p
    D_out = w.shape[0]

    d_pad = _round_up(max(D_out, 128), 128)
    out_isz = jnp.dtype(out_dtype).itemsize
    per_row_bytes = 2 * D_in * 2 + 2 * d_pad * 4 + 2 * d_pad * out_isz
    resident_bytes = D_in * d_pad * 2
    tn_eff, n_tiles = _pick_seq_tiling(S, tn, B, per_row_bytes, resident_bytes)
    n_pad = n_tiles * tn_eff

    # Patch rearrange 'b c (h p1) (w p2) -> b (h w) (p1 p2 c)'. Cast to bf16
    # first so the transpose/pad copies move half the bytes.
    xb = x_nchw.astype(jnp.bfloat16)
    xp = xb.reshape(B, C, hh, p, ww, p)
    xp = jnp.transpose(xp, (0, 2, 4, 3, 5, 1)).reshape(B, N, D_in)
    # One leading zero row (cls slot: matmul contributes exactly 0) + tail pad.
    xp_b = jnp.pad(xp, ((0, 0), (1, n_pad - S), (0, 0)))

    # W^T in bf16, feature-padded.
    w_t = jnp.pad(jnp.transpose(w).astype(jnp.bfloat16),
                  ((0, 0), (0, d_pad - D_out)))                  # (D_in, D_pad)

    # pos with bias folded in: row 0 = cls + pos[0] (bias-free, exact),
    # rows 1..N = pos[1:] + b.  Padded rows/lanes are zero -> padded output
    # rows are exactly 0 and get cropped below.
    pos2 = pos.reshape(S, D_out).astype(jnp.float32)
    row0 = cls_tok.reshape(1, D_out).astype(jnp.float32) + pos2[:1]
    rows = pos2[1:] + b.reshape(1, D_out).astype(jnp.float32)
    pos_full = jnp.concatenate([row0, rows], axis=0)             # (S, D_out)
    pos_full = jnp.pad(pos_full, ((0, n_pad - S), (0, d_pad - D_out)))

    grid = (n_tiles, B)   # batch innermost -> pos block index constant there

    out = pl.pallas_call(
        _embed_kernel,
        out_shape=jax.ShapeDtypeStruct((B, n_pad, d_pad), out_dtype),
        grid_spec=pltpu.PrefetchScalarGridSpec(
            num_scalar_prefetch=0,
            grid=grid,
            in_specs=[
                pl.BlockSpec((1, tn_eff, D_in), lambda j, bi: (bi, j, 0)),
                # Fully grid-invariant weight: fetched once, single-buffered.
                pl.BlockSpec((D_in, d_pad), lambda j, bi: (0, 0),
                             pipeline_mode=pl.Buffered(1)),
                # Block index constant along the inner (batch) axis -> the
                # pipeline elides the re-fetch; double-buffered across j.
                pl.BlockSpec((tn_eff, d_pad), lambda j, bi: (j, 0)),
            ],
            out_specs=pl.BlockSpec((1, tn_eff, d_pad),
                                   lambda j, bi: (bi, j, 0)),
        ),
        compiler_params=pltpu.CompilerParams(
            dimension_semantics=("parallel", "parallel")),
    )(xp_b, w_t, pos_full)

    if n_pad == S and d_pad == D_out:
        return out
    # Crop of the seq/feature padding; under jit this fuses into the consumer.
    return out[:, :S, :D_out]


if __name__ == "__main__":
    # Small shapes consistent with the module: B=2, C=4, H=W=16, patch=4 ->
    # N=16 patches, D_in = 4*4*4 = 64, hidden (input_dim) = 32.
    B, C, H, W = 2, 4, 16, 16
    patch_size = 4
    input_dim = 32
    N = (H * W) // (patch_size ** 2)
    D_in = C * patch_size ** 2

    key = jax.random.PRNGKey(0)
    kx, kw, kb, kc, kp = jax.random.split(key, 5)

    x = jax.random.normal(kx, (B, C, H, W), dtype=jnp.float32)
    w = jax.random.normal(kw, (input_dim, D_in), dtype=jnp.float32) * 0.02   # Linear weight
    b = jax.random.normal(kb, (input_dim,), dtype=jnp.float32) * 0.02        # Linear bias
    cls_tok = jax.random.uniform(kc, (1, 1, input_dim), dtype=jnp.float32)   # cls_embed
    pos = jax.random.uniform(kp, (1, N + 1, input_dim), dtype=jnp.float32)   # pos_embed

    out = input_embed(x, w, b, cls_tok, pos, patch_size=patch_size)
    out = jax.block_until_ready(out)

    # Pure-JAX reference (same intentional bf16 operand cast for x and W,
    # f32 accumulate) for sanity.
    hh = ww = H // patch_size
    xp = x.reshape(B, C, hh, patch_size, ww, patch_size)
    xp = jnp.transpose(xp, (0, 2, 4, 3, 5, 1)).reshape(B, N, D_in)
    xb = xp.astype(jnp.bfloat16).astype(jnp.float32)
    wb = w.astype(jnp.bfloat16).astype(jnp.float32)
    ref_patch = jnp.einsum("bnk,dk->bnd", xb, wb) + b
    ref = jnp.concatenate(
        [jnp.broadcast_to(cls_tok, (B, 1, input_dim)), ref_patch], axis=1) + pos

    assert out.shape == (B, N + 1, input_dim), out.shape
    assert jnp.allclose(out, ref, atol=2e-3, rtol=2e-3), \
        float(jnp.max(jnp.abs(out - ref)))

    print("KERNEL_OK")
</pallas_src>

<mosaic_0001>
module attributes {stable_mosaic.version = 11 : i64} {
  func.func @_embed_kernel(%arg0: i32, %arg1: i32, %arg2: memref<1x32x64xbf16, #tpu.memory_space<vmem>>, %arg3: memref<64x128xbf16, #tpu.memory_space<vmem>>, %arg4: memref<32x128xf32, #tpu.memory_space<vmem>>, %arg5: memref<1x32x128xf32, #tpu.memory_space<vmem>>) attributes {dimension_semantics = [#tpu.dimension_semantics<parallel>, #tpu.dimension_semantics<parallel>], iteration_bounds = array<i64: 1, 2>, scalar_prefetch = 0 : i64, scratch_operands = 0 : i64, tpu.core_type = #tpu.core_type<tc>, window_params = [{transform_indices = @transform_0, window_bounds = array<i64: 1, 32, 64>}, {pipeline_mode = #tpu.pipeline_mode<synchronous>, transform_indices = @transform_1, window_bounds = array<i64: 64, 128>}, {transform_indices = @transform_2, window_bounds = array<i64: 32, 128>}, {transform_indices = @transform_3, window_bounds = array<i64: 1, 32, 128>}]} {
    %c0 = arith.constant 0 : index
    %c0_0 = arith.constant 0 : index
    %c0_1 = arith.constant 0 : index
    %0 = vector.load %arg2[%c0, %c0_0, %c0_1] : memref<1x32x64xbf16, #tpu.memory_space<vmem>>, vector<1x32x64xbf16>
    %1 = vector.shape_cast %0 : vector<1x32x64xbf16> to vector<32x64xbf16>
    %c0_2 = arith.constant 0 : index
    %c0_3 = arith.constant 0 : index
    %2 = vector.load %arg3[%c0_2, %c0_3] : memref<64x128xbf16, #tpu.memory_space<vmem>>, vector<64x128xbf16>
    %cst = arith.constant dense<0.000000e+00> : vector<32x128xf32>
    %3 = tpu.matmul %1, %2, %cst {dimension_numbers = #tpu.dot_dimension_numbers<[1], [0], [0], [1], [0, 0, 1, 1], [], []>} : vector<32x64xbf16>, vector<64x128xbf16>, vector<32x128xf32> -> vector<32x128xf32>
    %c0_4 = arith.constant 0 : index
    %c0_5 = arith.constant 0 : index
    %4 = vector.load %arg4[%c0_4, %c0_5] : memref<32x128xf32, #tpu.memory_space<vmem>>, vector<32x128xf32>
    %5 = arith.addf %3, %4 : vector<32x128xf32>
    %c0_6 = arith.constant 0 : index
    %c0_7 = arith.constant 0 : index
    %c0_8 = arith.constant 0 : index
    %6 = vector.load %arg5[%c0_6, %c0_7, %c0_8] : memref<1x32x128xf32, #tpu.memory_space<vmem>>, vector<1x32x128xf32>
    %7 = vector.shape_cast %6 : vector<1x32x128xf32> to vector<32x128xf32>
    %8 = vector.shape_cast %5 : vector<32x128xf32> to vector<1x32x128xf32>
    tpu.vector_store %arg5[%c0_6, %c0_7, %c0_8], %8 {strides = array<i32>} : memref<1x32x128xf32, #tpu.memory_space<vmem>>, vector<1x32x128xf32>,
    return
  }
  func.func @transform_0(%arg0: i32, %arg1: i32) -> (i32, i32, i32) {
    %c0_i32 = arith.constant 0 : i32
    %c0_i32_0 = arith.constant 0 : i32
    return %arg1, %arg0, %c0_i32 : i32, i32, i32
  }
  func.func @transform_1(%arg0: i32, %arg1: i32) -> (i32, i32) {
    %c0_i32 = arith.constant 0 : i32
    %c0_i32_0 = arith.constant 0 : i32
    %c0_i32_1 = arith.constant 0 : i32
    return %c0_i32, %c0_i32_0 : i32, i32
  }
  func.func @transform_2(%arg0: i32, %arg1: i32) -> (i32, i32) {
    %c0_i32 = arith.constant 0 : i32
    %c0_i32_0 = arith.constant 0 : i32
    return %arg0, %c0_i32 : i32, i32
  }
  func.func @transform_3(%arg0: i32, %arg1: i32) -> (i32, i32, i32) {
    %c0_i32 = arith.constant 0 : i32
    %c0_i32_0 = arith.constant 0 : i32
    return %arg1, %arg0, %c0_i32 : i32, i32, i32
  }
}

</mosaic_0001>

<llo_original>
// kernel: input_embed.1
$region0: #{input_embed.1}
  #allocation0 [shape = 'u32[]', space=smem, size = 0x4, offset = 0x4, fixed_abs, tag = 'smem constant byte address 0x4 - core index']
  #allocation1 [shape = 'u32[72,128]{1,0:T(1,128)}', space=vmem, size = 0x9000, scoped, tag = 'internal scratch']
  %s0 = inlined_call_operand.vmem [shape: bf16[2,32,64], index: 0, kind: input, shape index: {}]
  %s1 = inlined_call_operand.vmem [shape: bf16[64,128], index: 1, kind: input, shape index: {}]
  %s2 = inlined_call_operand.vmem [shape: f32[32,128], index: 2, kind: input, shape index: {}]
  %s3 = inlined_call_operand.vmem [shape: f32[2,32,128], index: 3, kind: output, shape index: {}]
  %s4 = sld [smem:[#allocation0]]
  $region45: #{input_embed.1} parent=0
    _
  %s6 = ssub.s32 1, %s4
  %s7 = scalar_select 0, %s6, %s4
  loop: start=0, step=1, limit=4
  $region2: #{input_embed.1} parent=0 // loop_pre_header
    _
  $region3: #{input_embed.1} parent=0 // loop_header
    %s9 = sphi 0, %s13
    %p10 = scmp.ge.s32.totalorder %s9, 4
    %s16 = sphi 0, %s28
    %s17 = sphi 0, %s24
    %s18 = sphi 0, %s16
    %s19 = sphi 0, %s17
    %s20 = sphi 0, %s18
    %s21 = sphi 0, %s19
    %s33 = sphi 0, %s35
    %s36 = sphi 0, %s33
    %s37 = sphi 0, %s36
    %s53 = sphi 0, %s37
    %s57 = sphi 0, %s57
    %s59 = sphi 0, %s57
    %s60 = sphi 0, %s59
    %s74 = sphi 0, %s60
    %s80 = sphi 0, %s82
    %s83 = sphi 0, %s80
    %s84 = sphi 0, %s83
    %s100 = sphi 0, %s84
    %s108 = sphi 0, %s110
    %s111 = sphi 0, %s108
    %s112 = sphi 0, %s111
    %s128 = sphi 0, %s112
  $region4: #{input_embed.1} parent=0 // loop_header_branch
    %12 = sbr.rel (%p10) target = $region8
  $region5: #{input_embed.1} parent=0 // loop_body
    %s14 = ssub.s32 %s9, 1
    %s15 = ssub.s32 %s9, 2
    %s22 = sadd.s32 1, %s17
    %p23 = scmp.ge.s32.totalorder %s22, 2
    %s24 = scalar_select %p23, 0, %s22
    %s25 = sadd.s32 1, %s16
    %s26 = scalar_select %p23, %s25, %s16
    %p27 = scmp.ge.s32.totalorder %s26, 1
    %s28 = scalar_select %p27, 0, %s26
    %s29 = ssub.s32 %s17, %s24
    %s30 = ssub.s32 %s16, %s28
    %s31 = sor.u32 %s29, %s30
    %p32 = scmp.eq.s32.totalorder %s31, 0
    %s34 = sadd.s32 %s33, 1
    %s35 = scalar_select %p32, %s33, %s34
    %p38 = pneg %p32
    %p39 = scmp.eq.s32.totalorder %s9, 1
    %p40 = por %p38, %p39
    %p41 = scmp.ne.s32.totalorder %s33, %s36
    %p42 = scmp.eq.s32.totalorder %s9, 0
    %p43 = por %p41, %p42
    %p44 = scmp.ne.s32.totalorder %s33, %s36
    %p45 = scmp.eq.s32.totalorder %s14, 1
    %p46 = por %p44, %p45
    %p47 = scmp.ne.s32.totalorder %s36, %s37
    %p48 = scmp.eq.s32.totalorder %s14, 0
    %p49 = por %p47, %p48
    %p50 = scmp.ne.s32.totalorder %s36, %s37
    %p51 = scmp.eq.s32.totalorder %s15, 1
    %p52 = por %p50, %p51
    %p54 = scmp.ne.s32.totalorder %s37, %s53
    %p55 = scmp.eq.s32.totalorder %s15, 0
    %p56 = por %p54, %p55
    %s58 = sadd.s32 %s57, 1
    %p61 = scmp.eq.s32.totalorder %s9, 1
    %p62 = scmp.ne.s32.totalorder %s57, %s59
    %p63 = scmp.eq.s32.totalorder %s9, 0
    %p64 = por %p62, %p63
    %p65 = scmp.ne.s32.totalorder %s57, %s59
    %p66 = scmp.eq.s32.totalorder %s14, 1
    %p67 = por %p65, %p66
    %p68 = scmp.ne.s32.totalorder %s59, %s60
    %p69 = scmp.eq.s32.totalorder %s14, 0
    %p70 = por %p68, %p69
    %p71 = scmp.ne.s32.totalorder %s59, %s60
    %p72 = scmp.eq.s32.totalorder %s15, 1
    %p73 = por %p71, %p72
    %p75 = scmp.ne.s32.totalorder %s60, %s74
    %p76 = scmp.eq.s32.totalorder %s15, 0
    %p77 = por %p75, %p76
    %s78 = ssub.s32 %s16, %s28
    %p79 = scmp.eq.s32.totalorder %s78, 0
    %s81 = sadd.s32 %s80, 1
    %s82 = scalar_select %p79, %s80, %s81
    %p85 = pneg %p79
    %p86 = scmp.eq.s32.totalorder %s9, 1
    %p87 = por %p85, %p86
    %p88 = scmp.ne.s32.totalorder %s80, %s83
    %p89 = scmp.eq.s32.totalorder %s9, 0
    %p90 = por %p88, %p89
    %p91 = scmp.ne.s32.totalorder %s80, %s83
    %p92 = scmp.eq.s32.totalorder %s14, 1
    %p93 = por %p91, %p92
    %p94 = scmp.ne.s32.totalorder %s83, %s84
    %p95 = scmp.eq.s32.totalorder %s14, 0
    %p96 = por %p94, %p95
    %p97 = scmp.ne.s32.totalorder %s83, %s84
    %p98 = scmp.eq.s32.totalorder %s15, 1
    %p99 = por %p97, %p98
    %p101 = scmp.ne.s32.totalorder %s84, %s100
    %p102 = scmp.eq.s32.totalorder %s15, 0
    %p103 = por %p101, %p102
    %s104 = ssub.s32 %s17, %s24
    %s105 = ssub.s32 %s16, %s28
    %s106 = sor.u32 %s104, %s105
    %p107 = scmp.eq.s32.totalorder %s106, 0
    %s109 = sadd.s32 %s108, 1
    %s110 = scalar_select %p107, %s108, %s109
    %p113 = pneg %p107
    %p114 = scmp.eq.s32.totalorder %s9, 1
    %p115 = por %p113, %p114
    %p116 = scmp.ne.s32.totalorder %s108, %s111
    %p117 = scmp.eq.s32.totalorder %s9, 0
    %p118 = por %p116, %p117
    %p119 = scmp.ne.s32.totalorder %s108, %s111
    %p120 = scmp.eq.s32.totalorder %s14, 1
    %p121 = por %p119, %p120
    %p122 = scmp.ne.s32.totalorder %s111, %s112
    %p123 = scmp.eq.s32.totalorder %s14, 0
    %p124 = por %p122, %p123
    %p125 = scmp.ne.s32.totalorder %s111, %s112
    %p126 = scmp.eq.s32.totalorder %s15, 1
    %p127 = por %p125, %p126
    %p129 = scmp.ne.s32.totalorder %s112, %s128
    %p130 = scmp.eq.s32.totalorder %s15, 0
    %p131 = por %p129, %p130
    %p132 = scmp.le.s32.totalorder 1, %s9
    %p133 = scmp.lt.s32.totalorder %s9, 3
    %p134 = pnand %p132, %p133
    %p135 = pneg %p134
    // Predicated region
    $region9: #{input_embed.1} parent=5 // pred_check
      _
    $region10: #{input_embed.1} parent=5 // pred_check_branch
      %137 = sbr.rel (%p134) target = $region12
    $region11: #{input_embed.1} parent=5 // pred_region
      %s138 = ssub.s32 %s9, 1
      // Predicated region
      $region13: #{input_embed.1} parent=11 // pred_check
        %p139 = pneg %p70
      $region14: #{input_embed.1} parent=11 // pred_check_branch
        %141 = sbr.rel (%p139) target = $region16
      $region15: #{input_embed.1} parent=11 // pred_region
        _
      $region16: #{input_embed.1} parent=11 // pred_fallthru
        _
      // Predicated region
      $region17: #{input_embed.1} parent=11 // pred_check
        %p142 = pneg %p96
      $region18: #{input_embed.1} parent=11 // pred_check_branch
        %144 = sbr.rel (%p142) target = $region20
      $region19: #{input_embed.1} parent=11 // pred_region
        %s145 = smul.u32 4, %s18
        %p146 = scmp.lt.s32.totalorder %s145, 3
        %s147 = scalar_select %p146, %s145, 3
        %s148 = smul.addr %s147, 8
        %s149 = scalar_lea.vmem %s2, %s148
        %s150 = smul.u32 4, %s18
      $region20: #{input_embed.1} parent=11 // pred_fallthru
        _
    $region12: #{input_embed.1} parent=5 // pred_fallthru
      _
    %p151 = scmp.lt.s32.totalorder %s9, 2
    // Predicated region
    $region21: #{input_embed.1} parent=5 // pred_check
      %p152 = pneg %p151
    $region22: #{input_embed.1} parent=5 // pred_check_branch
      %154 = sbr.rel (%p152) target = $region24
    $region23: #{input_embed.1} parent=5 // pred_region
      // Predicated region
      $region25: #{input_embed.1} parent=23 // pred_check
        %p155 = pneg %p43
      $region26: #{input_embed.1} parent=23 // pred_check_branch
        %157 = sbr.rel (%p155) target = $region28
      $region27: #{input_embed.1} parent=23 // pred_region
        %s158 = smul.u32 4, %s16
        %p159 = scmp.lt.s32.totalorder %s17, 1
        %s160 = scalar_select %p159, %s17, 1
        %p161 = scmp.lt.s32.totalorder %s158, 3
        %s162 = scalar_select %p161, %s158, 3
        %s163 = smul.addr %s160, 4
        %s164 = sadd.s32 %s162, %s163
        %s165 = smul.addr %s164, 4
        %s166 = scalar_lea.vmem %s0, %s165
        %s167 = smul.u32 4, %s16
      $region28: #{input_embed.1} parent=23 // pred_fallthru
        _
    $region24: #{input_embed.1} parent=5 // pred_fallthru
      _
    %p168 = scmp.le.s32.totalorder 1, %s9
    %p169 = scmp.lt.s32.totalorder %s9, 3
    %p170 = pnand %p168, %p169
    %p171 = pneg %p170
    // Predicated region
    $region29: #{input_embed.1} parent=5 // pred_check
      _
    $region30: #{input_embed.1} parent=5 // pred_check_branch
      %173 = sbr.rel (%p170) target = $region32
    $region31: #{input_embed.1} parent=5 // pred_region
      %s174 = ssub.s32 %s9, 1
      %s175 = smul.u32 4, %s18
      %p176 = scmp.lt.s32.totalorder %s19, 1
      %s177 = scalar_select %p176, %s19, 1
      %p178 = scmp.lt.s32.totalorder %s175, 3
      %s179 = scalar_select %p178, %s175, 3
      %s180 = smul.addr %s177, 4
      %s181 = sadd.s32 %s179, %s180
      %s182 = smul.addr %s181, 4
      %s183 = scalar_lea.vmem %s0, %s182
      %p184 = pneg %p49
      %p185 = pneg %p46
      %p186 = pneg %p70
      %p187 = pneg %p67
      %s188 = smul.u32 4, %s18
      %p189 = scmp.lt.s32.totalorder %s188, 3
      %s190 = scalar_select %p189, %s188, 3
      %s191 = smul.addr %s190, 8
      %s192 = scalar_lea.vmem %s2, %s191
      %p193 = pneg %p96
      %p194 = pneg %p93
      %p195 = pneg %p124
      %p196 = pneg %p121
      %s197 = smul.u32 4, %s18
      %p198 = scmp.lt.s32.totalorder %s19, 1
      %s199 = scalar_select %p198, %s19, 1
      %p200 = scmp.lt.s32.totalorder %s197, 3
      %s201 = scalar_select %p200, %s197, 3
      %s202 = smul.addr %s199, 4
      %s203 = sadd.s32 %s201, %s202
      %s204 = smul.addr %s203, 8
      %s205 = scalar_lea.vmem %s3, %s204
      %s206 = smul.u32 4, %s18
      %p207 = scmp.lt.s32.totalorder %s19, 1
      %s208 = scalar_select %p207, %s19, 1
      %p209 = scmp.lt.s32.totalorder %s206, 3
      %s210 = scalar_select %p209, %s206, 3
      %s211 = smul.addr %s208, 4
      %s212 = sadd.s32 %s210, %s211
      %s213 = smul.addr %s212, 4
      %s214 = scalar_lea.vmem %s0, %s213
      %s215 = smul.u32 4, %s18
      %s216 = smul.u32 4, %s18
      %p217 = scmp.lt.s32.totalorder %s216, 3
      %s218 = scalar_select %p217, %s216, 3
      %s219 = smul.addr %s218, 8
      %s220 = scalar_lea.vmem %s2, %s219
      %s221 = smul.u32 4, %s18
      %s222 = smul.u32 4, %s18
      %p223 = scmp.lt.s32.totalorder %s19, 1
      %s224 = scalar_select %p223, %s19, 1
      %p225 = scmp.lt.s32.totalorder %s222, 3
      %s226 = scalar_select %p225, %s222, 3
      %s227 = smul.addr %s224, 4
      %s228 = sadd.s32 %s226, %s227
      %s229 = smul.addr %s228, 8
      %s230 = scalar_lea.vmem %s3, %s229
      %s231 = smul.u32 4, %s18
      %v233 = vld [vmem:[%s214] sm:$0xf]
      %v234 = vld [vmem:[%s214 + $0x4] sm:$0xf]
      %v235 = vld [vmem:[%s214 + $0x8] sm:$0xf]
      %v236 = vld [vmem:[%s214 + $0xc] sm:$0xf]
      %v237 = vld [vmem:[%s1] sm:$0xf]
      %v238 = vld [vmem:[%s1 + $0x4] sm:$0xf]
      %v239 = vld [vmem:[%s1 + $0x8] sm:$0xf]
      %v240 = vld [vmem:[%s1 + $0xc] sm:$0xf]
      %v241 = vld [vmem:[%s1 + $0x10] sm:$0xf]
      %v242 = vld [vmem:[%s1 + $0x14] sm:$0xf]
      %v243 = vld [vmem:[%s1 + $0x18] sm:$0xf]
      %v244 = vld [vmem:[%s1 + $0x1c] sm:$0xf]
      %v245 = vld [vmem:[%s220] sm:$0xff]
      %v246 = vld [vmem:[%s220 + $0x8] sm:$0xff]
      %v247 = vld [vmem:[%s220 + $0x10] sm:$0xff]
      %v248 = vld [vmem:[%s220 + $0x18] sm:$0xff]
      %v253 = vunpack.c.l.b16 %v233
      %v254 = vunpack.c.l.b16 %v234
      %v255 = vunpack.c.l.b16 %v235
      %v256 = vunpack.c.l.b16 %v236
      %v257 = vpack.c.b16 %v254, %v253
      %v258 = vpack.c.b16 %v256, %v255
      %v267 = vunpack.c.l.b16 %v237
      %v268 = vunpack.c.l.b16 %v238
      %v269 = vunpack.c.l.b16 %v239
      %v270 = vunpack.c.l.b16 %v240
      %v271 = vunpack.c.l.b16 %v241
      %v272 = vunpack.c.l.b16 %v242
      %v273 = vunpack.c.l.b16 %v243
      %v274 = vunpack.c.l.b16 %v244
      %v275 = vpack.c.b16 %v268, %v267
      %v276 = vpack.c.b16 %v270, %v269
      %v277 = vpack.c.b16 %v272, %v271
      %v278 = vpack.c.b16 %v274, %v273
      %vm283 = vcmask 523264
      %v285 = vsel %vm283, %v257, 0
      %v288 = vsel %vm283, %v258, 0
      %290 = vmatpush.bf16.msra.mxu0 0
      %291 = vmatpush.bf16.msra.mxu0 0
      %292 = vmatpush.bf16.msra.mxu0 0
      %293 = vmatpush.bf16.msra.mxu0 0
      %294 = vmatpush.bf16.msra.mxu0 %v278
      %295 = vmatpush.bf16.msra.mxu0 %v277
      %296 = vmatpush.bf16.msra.mxu0 %v276
      %297 = vmatpush.bf16.msra.mxu0 %v275
      %298 = vmatmul.bf16.gmra.mxu0 %v285
      %v299 = vpop.f32.mrf.mxu0
      %v300 = vadd.f32 %v245, %v299
      %v301 = vpop.f32.mrf.mxu0
      %v302 = vadd.f32 %v246, %v301
      %303 = vmatmul.bf16.gmra.mxu0 %v288
      %v304 = vpop.f32.mrf.mxu0
      %v305 = vadd.f32 %v247, %v304
      %v306 = vpop.f32.mrf.mxu0
      %v307 = vadd.f32 %v248, %v306
      %308 = vdwg.mxu0
      %309 = vst [vmem:[%s230] sm:$0xff] %v300
      %310 = vst [vmem:[%s230 + $0x8] sm:$0xff] %v302
      %311 = vst [vmem:[%s230 + $0x10] sm:$0xff] %v305
      %312 = vst [vmem:[%s230 + $0x18] sm:$0xff] %v307
      %s313 = smul.u32 4, %s18
      %p314 = scmp.lt.s32.totalorder %s19, 1
      %s315 = scalar_select %p314, %s19, 1
      %p316 = scmp.lt.s32.totalorder %s313, 3
      %s317 = scalar_select %p316, %s313, 3
      %s318 = smul.addr %s315, 4
      %s319 = sadd.s32 %s317, %s318
      %s320 = smul.addr %s319, 8
      %s321 = scalar_lea.vmem %s3, %s320
      // Predicated region
      $region33: #{input_embed.1} parent=31 // pred_check
        %p322 = pneg %p121
      $region34: #{input_embed.1} parent=31 // pred_check_branch
        %324 = sbr.rel (%p322) target = $region36
      $region35: #{input_embed.1} parent=31 // pred_region
        %s325 = smul.u32 4, %s18
      $region36: #{input_embed.1} parent=31 // pred_fallthru
        _
    $region32: #{input_embed.1} parent=5 // pred_fallthru
      _
    %p326 = scmp.le.s32.totalorder 2, %s9
    // Predicated region
    $region37: #{input_embed.1} parent=5 // pred_check
      %p327 = pneg %p326
    $region38: #{input_embed.1} parent=5 // pred_check_branch
      %329 = sbr.rel (%p327) target = $region40
    $region39: #{input_embed.1} parent=5 // pred_region
      %s330 = ssub.s32 %s9, 2
      // Predicated region
      $region41: #{input_embed.1} parent=39 // pred_check
        %p331 = pneg %p127
      $region42: #{input_embed.1} parent=39 // pred_check_branch
        %333 = sbr.rel (%p331) target = $region44
      $region43: #{input_embed.1} parent=39 // pred_region
        %s334 = smul.u32 4, %s20
        %p335 = scmp.lt.s32.totalorder %s21, 1
        %s336 = scalar_select %p335, %s21, 1
        %p337 = scmp.lt.s32.totalorder %s334, 3
        %s338 = scalar_select %p337, %s334, 3
        %s339 = smul.addr %s336, 4
        %s340 = sadd.s32 %s338, %s339
        %s341 = smul.addr %s340, 8
        %s342 = scalar_lea.vmem %s3, %s341
      $region44: #{input_embed.1} parent=39 // pred_fallthru
        _
    $region40: #{input_embed.1} parent=5 // pred_fallthru
      _
  $region6: #{input_embed.1} parent=0 // loop_footer
    %s13 = sadd.s32 1, %s9
  $region7: #{input_embed.1} parent=0 // loop_footer_branch
    %8 = sbr.rel target = $region3
  $region8: #{input_embed.1} parent=0 // loop_exit
    _

</llo_original>
